<compile_context>
chip_gen: v6e
topology: v6e:2x2x1
jax: 0.10.0
libtpu: 0.0.40
codegen_flags: <defaults>
</compile_context>

<pallas_src>
import functools
import math

import jax
import jax.numpy as jnp
from jax.experimental import pallas as pl
from jax.experimental.pallas import tpu as pltpu


def self_attention_kernel(x_ref,      # VMEM (1, C, S)   S = Bt*W, lane-dense (mult of 128)
                          w_ref,      # VMEM (C+2*CP, C) stacked [gamma*Wv; Wq_pad; Wk_pad]
                          b_ref,      # VMEM (C+2*CP, 1) stacked bias (padded rows are 0)
                          mask_ref,   # VMEM (S, S) f32 block-diagonal 0/1 mask (resident)
                          o_ref,      # VMEM (1, C, S)
                          *, C, CP, use_bf16_mxu):
    x = x_ref[0]                                                       # (C, S)

    # One fused 1x1-conv projection for v, q, k across all Bt batches: (C+2CP, C) @ (C, S).
    proj = jnp.dot(w_ref[...], x, preferred_element_type=jnp.float32) + b_ref[...]
    v = proj[:C]                # (C,  S)  already scaled by gamma (folded in wrapper)
    q = proj[C:C + CP]          # (CP, S)  rows >= C//8 are exactly zero
    k = proj[C + CP:]           # (CP, S)  rows >= C//8 are exactly zero

    if use_bf16_mxu:            # bf16 operands for the attention matmuls; f32 accumulation.
        q = q.astype(jnp.bfloat16)
        k = k.astype(jnp.bfloat16)
        v = v.astype(jnp.bfloat16)

    # scores = q^T @ k for every batch in one matmul: contract the channel dim of both
    # operands (no explicit transpose -> the MXU reads the operand transposed).
    scores = jax.lax.dot_general(q, k, (((0,), (0,)), ((), ())),
                                 preferred_element_type=jnp.float32)   # (S, S) f32

    # Block-diagonal mask: cross-batch scores must not contribute. Masking after tanh is
    # exact because tanh(0) == 0; the mask is a resident 0/1 f32 slab (no per-step iotas).
    attn = jnp.tanh(scores) * mask_ref[...]                            # (S, S) f32

    # out_b = v_b @ attn_b^T; with block-diagonal attn this is exactly one
    # (C, S) x (S, S) matmul contracting dim 1 of both operands.
    out = jax.lax.dot_general(v, attn.astype(v.dtype), (((1,), (1,)), ((), ())),
                              preferred_element_type=jnp.float32)      # (C, S) f32

    o_ref[0] = (out + x).astype(o_ref.dtype)


def self_attention(x, params, *, use_bf16_mxu=False):
    """x: (B, C, W) float32. params: dict of wq,bq,wk,bk,wv,bv,gamma (PyTorch shapes)."""
    B, C, W = x.shape
    C8 = C // 8
    CP = max(8, ((C8 + 7) // 8) * 8)          # q/k channel rows padded to sublane multiple
    Cs = C + 2 * CP                           # stacked projection rows

    # --- Slab sizing: S = Bt*W must be a multiple of 128 (lane-dense, unmasked stores),
    # --- targeting ~256 lanes to fill the 256-wide MXU / halve per-step overhead.
    TARGET_S = 256
    step = 128 // math.gcd(W, 128)            # minimal Bt making S a multiple of 128
    Bt = step * max(1, TARGET_S // (step * W))
    Bt = min(Bt, step * pl.cdiv(B, step))     # don't over-pad the batch dim
    G = pl.cdiv(B, Bt)                        # grid steps
    Bp = G * Bt
    S = Bt * W

    x_p = jnp.pad(x, ((0, Bp - B), (0, 0), (0, 0))) if Bp != B else x
    # Layout plumbing (outside the kernel): (Bp, C, W) -> (G, C, Bt*W) lane-dense slabs.
    x_slab = x_p.reshape(G, Bt, C, W).transpose(0, 2, 1, 3).reshape(G, C, S)

    # --- Fold gamma into the value projection (exact: gamma*(v@attn^T) == (gamma*v)@attn^T)
    gamma = params["gamma"].reshape(())
    wv = params["wv"] * gamma                                   # (C, C)
    bv = params["bv"] * gamma                                   # (C,)
    # --- Stack [gamma*Wv; Wq zero-padded; Wk zero-padded]; padded rows AND biases are zero,
    # --- so they contribute nothing to the q^T k contraction.
    wq_p = jnp.zeros((CP, C), jnp.float32).at[:C8].set(params["wq"])
    wk_p = jnp.zeros((CP, C), jnp.float32).at[:C8].set(params["wk"])
    bq_p = jnp.zeros((CP,), jnp.float32).at[:C8].set(params["bq"])
    bk_p = jnp.zeros((CP,), jnp.float32).at[:C8].set(params["bk"])
    w_stack = jnp.concatenate([wv, wq_p, wk_p], axis=0)          # (Cs, C)
    b_stack = jnp.concatenate([bv, bq_p, bk_p]).reshape(Cs, 1)   # (Cs, 1)

    # --- Precomputed block-diagonal mask, DMA'd once (constant index_map) and resident.
    batch_of = jnp.arange(S, dtype=jnp.int32) // W
    mask = (batch_of[:, None] == batch_of[None, :]).astype(jnp.float32)   # (S, S)

    if use_bf16_mxu:
        # Cast matmul operands in the wrapper (halves x-slab DMA; native bf16 MXU path on
        # v5e/v6e/v7x). Elementwise epilogue / bias / mask stay f32.
        x_slab = x_slab.astype(jnp.bfloat16)
        w_stack = w_stack.astype(jnp.bfloat16)

    full = lambda shape: pl.BlockSpec(shape, lambda g: (0,) * len(shape))

    # Cost estimate counts the full SxS slab work (incl. masked cross-batch blocks).
    flops = G * (2 * Cs * C * S + 2 * CP * S * S + 2 * C * S * S)
    transcendentals = G * S * S
    bytes_accessed = 4 * (2 * G * C * S + Cs * C + Cs + S * S)

    out_slab = pl.pallas_call(
        functools.partial(self_attention_kernel, C=C, CP=CP, use_bf16_mxu=use_bf16_mxu),
        out_shape=jax.ShapeDtypeStruct((G, C, S), jnp.float32),
        grid=(G,),
        in_specs=[
            pl.BlockSpec((1, C, S), lambda g: (g, 0, 0)),   # x slab (lane-dense)
            full((Cs, C)),                                  # stacked projection weights
            full((Cs, 1)),                                  # stacked projection bias
            full((S, S)),                                   # block-diagonal mask (resident)
        ],
        out_specs=pl.BlockSpec((1, C, S), lambda g: (g, 0, 0)),
        compiler_params=pltpu.CompilerParams(
            dimension_semantics=("parallel",),              # megacore split when G >= 2
            vmem_limit_bytes=32 * 1024 * 1024),
        cost_estimate=pl.CostEstimate(
            flops=flops, transcendentals=transcendentals, bytes_accessed=bytes_accessed),
    )(x_slab, w_stack, b_stack, mask)

    out = out_slab.reshape(G, C, Bt, W).transpose(0, 2, 1, 3).reshape(Bp, C, W)
    return out[:B] if Bp != B else out


def init_params(key, C):
    """Deterministic parameter init matching the module's shapes.
    query_conv / key_conv: Conv1d(C, C//8, 1) -> weight (C//8, C), bias (C//8,)
    value_conv:            Conv1d(C, C, 1)    -> weight (C, C),    bias (C,)
    gamma:                 zeros(1)           (as in the PyTorch __init__)
    """
    C8 = C // 8
    ks = jax.random.split(key, 6)
    scale = 1.0 / jnp.sqrt(C)
    return {
        "wq": jax.random.uniform(ks[0], (C8, C), jnp.float32, -scale, scale),
        "bq": jax.random.uniform(ks[1], (C8,), jnp.float32, -scale, scale),
        "wk": jax.random.uniform(ks[2], (C8, C), jnp.float32, -scale, scale),
        "bk": jax.random.uniform(ks[3], (C8,), jnp.float32, -scale, scale),
        "wv": jax.random.uniform(ks[4], (C, C), jnp.float32, -scale, scale),
        "bv": jax.random.uniform(ks[5], (C,), jnp.float32, -scale, scale),
        "gamma": jnp.zeros((1,), jnp.float32),
    }


def reference(x, p):
    """Pure-JAX reference (mirrors the PyTorch forward)."""
    q = jnp.einsum("oc,bcw->bow", p["wq"], x) + p["bq"][None, :, None]   # (B,C8,W)
    k = jnp.einsum("oc,bcw->bow", p["wk"], x) + p["bk"][None, :, None]
    v = jnp.einsum("oc,bcw->bow", p["wv"], x) + p["bv"][None, :, None]
    attn = jnp.tanh(jnp.einsum("bcq,bck->bqk", q, k))                    # (B,W,W)
    out = jnp.einsum("bcw,bqw->bcq", v, attn)                            # v @ attn^T
    return p["gamma"][0] * out + x


if __name__ == "__main__":
    # in_dim=32 -> in_dim//8 = 4; B=16, W=16 -> Bt=16 batches/slab (256 lanes), 1 grid step.
    B, C, W = 16, 32, 16
    key = jax.random.PRNGKey(0)
    kx, kp = jax.random.split(key)
    x = jax.random.normal(kx, (B, C, W), jnp.float32)
    params = init_params(kp, C)
    # Use a nonzero gamma so the attention path actually contributes
    # (the module inits gamma=0; semantics are identical either way).
    params["gamma"] = jnp.array([0.5], jnp.float32)

    out = self_attention(x, params)
    jax.block_until_ready(out)

    ref = reference(x, params)
    assert out.shape == (B, C, W)
    max_err = float(jnp.max(jnp.abs(out - ref)))
    assert jnp.allclose(out, ref, atol=1e-4, rtol=1e-4), max_err
    print("KERNEL_OK")
</pallas_src>

<mosaic_0001>
module attributes {stable_mosaic.version = 11 : i64} {
  func.func @self_attention_kernel(%arg0: i32, %arg1: memref<1x32x256xf32, #tpu.memory_space<vmem>>, %arg2: memref<48x32xf32, #tpu.memory_space<vmem>>, %arg3: memref<48x1xf32, #tpu.memory_space<vmem>>, %arg4: memref<256x256xf32, #tpu.memory_space<vmem>>, %arg5: memref<1x32x256xf32, #tpu.memory_space<vmem>>) attributes {dimension_semantics = [#tpu.dimension_semantics<parallel>], iteration_bounds = array<i64: 1>, scalar_prefetch = 0 : i64, scratch_operands = 0 : i64, tpu.core_type = #tpu.core_type<tc>, window_params = [{transform_indices = @transform_0, window_bounds = array<i64: 1, 32, 256>}, {pipeline_mode = #tpu.pipeline_mode<synchronous>, transform_indices = @transform_1, window_bounds = array<i64: 48, 32>}, {pipeline_mode = #tpu.pipeline_mode<synchronous>, transform_indices = @transform_2, window_bounds = array<i64: 48, 1>}, {pipeline_mode = #tpu.pipeline_mode<synchronous>, transform_indices = @transform_3, window_bounds = array<i64: 256, 256>}, {transform_indices = @transform_4, window_bounds = array<i64: 1, 32, 256>}]} {
    %c0 = arith.constant 0 : index
    %c0_0 = arith.constant 0 : index
    %c0_1 = arith.constant 0 : index
    %0 = vector.load %arg1[%c0, %c0_0, %c0_1] : memref<1x32x256xf32, #tpu.memory_space<vmem>>, vector<1x32x256xf32>
    %1 = vector.shape_cast %0 : vector<1x32x256xf32> to vector<32x256xf32>
    %c0_2 = arith.constant 0 : index
    %c0_3 = arith.constant 0 : index
    %2 = vector.load %arg2[%c0_2, %c0_3] : memref<48x32xf32, #tpu.memory_space<vmem>>, vector<48x32xf32>
    %cst = arith.constant dense<0.000000e+00> : vector<48x256xf32>
    %3 = tpu.matmul %2, %1, %cst {dimension_numbers = #tpu.dot_dimension_numbers<[1], [0], [0], [1], [0, 0, 1, 1], [], []>} : vector<48x32xf32>, vector<32x256xf32>, vector<48x256xf32> -> vector<48x256xf32>
    %c0_4 = arith.constant 0 : index
    %c0_5 = arith.constant 0 : index
    %4 = vector.load %arg3[%c0_4, %c0_5] : memref<48x1xf32, #tpu.memory_space<vmem>>, vector<48x1xf32>
    %5 = vector.broadcast %4 : vector<48x1xf32> to vector<48x256xf32>
    %6 = arith.addf %3, %5 : vector<48x256xf32>
    %7 = vector.extract_strided_slice %6 {offsets = [0, 0], sizes = [32, 256], strides = [1, 1]} : vector<48x256xf32> to vector<32x256xf32>
    %8 = vector.extract_strided_slice %6 {offsets = [32, 0], sizes = [8, 256], strides = [1, 1]} : vector<48x256xf32> to vector<8x256xf32>
    %9 = vector.extract_strided_slice %6 {offsets = [40, 0], sizes = [8, 256], strides = [1, 1]} : vector<48x256xf32> to vector<8x256xf32>
    %cst_6 = arith.constant dense<0.000000e+00> : vector<256x256xf32>
    %10 = tpu.matmul %8, %9, %cst_6 {dimension_numbers = #tpu.dot_dimension_numbers<[0], [0], [1], [1], [0, 1, 1, 1], [], []>} : vector<8x256xf32>, vector<8x256xf32>, vector<256x256xf32> -> vector<256x256xf32>
    %11 = math.tanh %10 : vector<256x256xf32>
    %c0_7 = arith.constant 0 : index
    %c0_8 = arith.constant 0 : index
    %12 = vector.load %arg4[%c0_7, %c0_8] : memref<256x256xf32, #tpu.memory_space<vmem>>, vector<256x256xf32>
    %13 = arith.mulf %11, %12 : vector<256x256xf32>
    %cst_9 = arith.constant dense<0.000000e+00> : vector<32x256xf32>
    %14 = tpu.matmul %7, %13, %cst_9 {dimension_numbers = #tpu.dot_dimension_numbers<[1], [1], [0], [0], [0, 0, 1, 0], [], []>} : vector<32x256xf32>, vector<256x256xf32>, vector<32x256xf32> -> vector<32x256xf32>
    %15 = arith.addf %14, %1 : vector<32x256xf32>
    %c0_10 = arith.constant 0 : index
    %c0_11 = arith.constant 0 : index
    %c0_12 = arith.constant 0 : index
    %16 = vector.load %arg5[%c0_10, %c0_11, %c0_12] : memref<1x32x256xf32, #tpu.memory_space<vmem>>, vector<1x32x256xf32>
    %17 = vector.shape_cast %16 : vector<1x32x256xf32> to vector<32x256xf32>
    %18 = vector.shape_cast %15 : vector<32x256xf32> to vector<1x32x256xf32>
    tpu.vector_store %arg5[%c0_10, %c0_11, %c0_12], %18 {strides = array<i32>} : memref<1x32x256xf32, #tpu.memory_space<vmem>>, vector<1x32x256xf32>,
    return
  }
  func.func @transform_0(%arg0: i32) -> (i32, i32, i32) {
    %c0_i32 = arith.constant 0 : i32
    %c0_i32_0 = arith.constant 0 : i32
    %c0_i32_1 = arith.constant 0 : i32
    return %arg0, %c0_i32, %c0_i32_0 : i32, i32, i32
  }
  func.func @transform_1(%arg0: i32) -> (i32, i32) {
    %c0_i32 = arith.constant 0 : i32
    %c0_i32_0 = arith.constant 0 : i32
    %c0_i32_1 = arith.constant 0 : i32
    return %c0_i32, %c0_i32_0 : i32, i32
  }
  func.func @transform_2(%arg0: i32) -> (i32, i32) {
    %c0_i32 = arith.constant 0 : i32
    %c0_i32_0 = arith.constant 0 : i32
    %c0_i32_1 = arith.constant 0 : i32
    return %c0_i32, %c0_i32_0 : i32, i32
  }
  func.func @transform_3(%arg0: i32) -> (i32, i32) {
    %c0_i32 = arith.constant 0 : i32
    %c0_i32_0 = arith.constant 0 : i32
    %c0_i32_1 = arith.constant 0 : i32
    return %c0_i32, %c0_i32_0 : i32, i32
  }
  func.func @transform_4(%arg0: i32) -> (i32, i32, i32) {
    %c0_i32 = arith.constant 0 : i32
    %c0_i32_0 = arith.constant 0 : i32
    %c0_i32_1 = arith.constant 0 : i32
    return %arg0, %c0_i32, %c0_i32_0 : i32, i32, i32
  }
}

</mosaic_0001>

<llo_original>
// kernel: tpu_custom_call.1
$region0: #{tpu_custom_call.1}
  #allocation0 [shape = 'u32[]', space=smem, size = 0x4, offset = 0x4, fixed_abs, tag = 'smem constant byte address 0x4 - core index']
  #allocation1 [shape = 'u32[144,128]{1,0:T(1,128)}', space=vmem, size = 0x12000, scoped, tag = 'internal scratch']
  %s0 = inlined_call_operand.vmem [shape: f32[1,32,256], index: 0, kind: input, shape index: {}]
  %s1 = inlined_call_operand.vmem [shape: f32[48,32], index: 1, kind: input, shape index: {}]
  %s2 = inlined_call_operand.vmem [shape: f32[48,1], index: 2, kind: input, shape index: {}]
  %s3 = inlined_call_operand.hbm [shape: f32[256,256], index: 3, kind: input, shape index: {}]
  %s4 = inlined_call_operand.hbm [shape: f32[1,32,256], index: 4, kind: output, shape index: {}]
  %s5 = sld [smem:[#allocation0]]
  $region30: #{tpu_custom_call.1} parent=0
    _
  %s7 = ssub.s32 1, %s5
  %s8 = scalar_select 0, %s7, %s5
  $region1: #{tpu_custom_call.1} parent=0
    #allocation2 [shape = 'u8[262144]{0}', space=vmem, size = 0x40000, scoped, tag = 'input window, operand 3, single buffered']
    #allocation3 [shape = 's32[1]{0}', space=sflag, size = 0x4, scoped, tag = 'scoped memory for tpu_custom_call.1']
    #allocation4 [shape = 's32[1]{0}', space=sflag, size = 0x4, scoped, tag = 'scoped memory for tpu_custom_call.1']
    #allocation5 [shape = 'u8[32768]{0}', space=vmem, size = 0x8000, scoped, tag = 'output window, operand 0, single buffered']
    %9 = vsyncpa [#allocation3], 0
    %10 = vsyncpa [#allocation4], 0
    // Predicated region
    $region2: #{tpu_custom_call.1} parent=1 // pred_check
      _
    $region3: #{tpu_custom_call.1} parent=1 // pred_check_branch
      %12 = sbr.rel (0) target = $region5
    $region4: #{tpu_custom_call.1} parent=1 // pred_region
      _
    $region5: #{tpu_custom_call.1} parent=1 // pred_fallthru
      _
    // Predicated region
    $region6: #{tpu_custom_call.1} parent=1 // pred_check
      _
    $region7: #{tpu_custom_call.1} parent=1 // pred_check_branch
      %14 = sbr.rel (0) target = $region9
    $region8: #{tpu_custom_call.1} parent=1 // pred_region
      _
    $region9: #{tpu_custom_call.1} parent=1 // pred_fallthru
      _
    // Predicated region
    $region10: #{tpu_custom_call.1} parent=1 // pred_check
      _
    $region11: #{tpu_custom_call.1} parent=1 // pred_check_branch
      %16 = sbr.rel (0) target = $region13
    $region12: #{tpu_custom_call.1} parent=1 // pred_region
      _
    $region13: #{tpu_custom_call.1} parent=1 // pred_fallthru
      _
    // Predicated region
    $region14: #{tpu_custom_call.1} parent=1 // pred_check
      _
    $region15: #{tpu_custom_call.1} parent=1 // pred_check_branch
      %18 = sbr.rel (0) target = $region17
    $region16: #{tpu_custom_call.1} parent=1 // pred_region
      %s20 = ssub.s32 8192, 8192
      %21 = vsyncadd [#allocation3], %s20
      %s22 = sshll.u32 [#allocation2], 4
      %s23 = int_to_ptr.vmem [resolvable:$true] %s22
      %28 = dma.hbm_to_vmem [thread:$0]  %s3, 8192, %s23, [#allocation3], 256, 256, 16
    $region17: #{tpu_custom_call.1} parent=1 // pred_fallthru
      _
    // Predicated region
    $region18: #{tpu_custom_call.1} parent=1 // pred_check
      _
    $region19: #{tpu_custom_call.1} parent=1 // pred_check_branch
      %30 = sbr.rel (0) target = $region21
    $region20: #{tpu_custom_call.1} parent=1 // pred_region
      %31 = dma.done [#allocation3], 8192
    $region21: #{tpu_custom_call.1} parent=1 // pred_fallthru
      _
    %v32 = vld [vmem:[%s0] sm:$0xff]
    %v33 = vld [vmem:[%s0 + $0x8] sm:$0xff]
    %v34 = vld [vmem:[%s0 + $0x10] sm:$0xff]
    %v35 = vld [vmem:[%s0 + $0x18] sm:$0xff]
    %v36 = vld [vmem:[%s0 + $0x20] sm:$0xff]
    %v37 = vld [vmem:[%s0 + $0x28] sm:$0xff]
    %v38 = vld [vmem:[%s0 + $0x30] sm:$0xff]
    %v39 = vld [vmem:[%s0 + $0x38] sm:$0xff]
    %v40 = vld [vmem:[%s1] sm:$0xff]
    %v41 = vld [vmem:[%s1 + $0x8] sm:$0xff]
    %v42 = vld [vmem:[%s1 + $0x10] sm:$0xff]
    %v43 = vld [vmem:[%s1 + $0x18] sm:$0xff]
    %v44 = vld [vmem:[%s1 + $0x20] sm:$0xff]
    %v45 = vld [vmem:[%s1 + $0x28] sm:$0xff]
    %v46 = vld [vmem:[%s2] sm:$0xff]
    %v47 = vld [vmem:[%s2 + $0x8] sm:$0xff]
    %v48 = vld [vmem:[%s2 + $0x10] sm:$0xff]
    %v49 = vld [vmem:[%s2 + $0x18] sm:$0xff]
    %v50 = vld [vmem:[%s2 + $0x20] sm:$0xff]
    %v51 = vld [vmem:[%s2 + $0x28] sm:$0xff]
    %53 = vset.pattern.permute.xlu0 0
    %54 = vperm.xlu0 %53, %v46
    %v55 = vpop.permute.xlu0 %54
    %58 = vset.pattern.permute.xlu0 0
    %59 = vperm.xlu0 %58, %v47
    %v60 = vpop.permute.xlu0 %59
    %63 = vset.pattern.permute.xlu0 0
    %64 = vperm.xlu0 %63, %v48
    %v65 = vpop.permute.xlu0 %64
    %68 = vset.pattern.permute.xlu0 0
    %69 = vperm.xlu0 %68, %v49
    %v70 = vpop.permute.xlu0 %69
    %73 = vset.pattern.permute.xlu0 0
    %74 = vperm.xlu0 %73, %v50
    %v75 = vpop.permute.xlu0 %74
    %78 = vset.pattern.permute.xlu0 0
    %79 = vperm.xlu0 %78, %v51
    %v80 = vpop.permute.xlu0 %79
    %vm82 = vcmask 261120
    %v84 = vsel %vm82, %v40, 0
    %v87 = vsel %vm82, %v41, 0
    %v90 = vsel %vm82, %v42, 0
    %v93 = vsel %vm82, %v43, 0
    %v96 = vsel %vm82, %v44, 0
    %v99 = vsel %vm82, %v45, 0
    %101 = vmatprep.subr.mxu0 0.0
    %102 = vmatpush1.msra.mxu0 0.0
    %103 = vmatprep.subr.mxu0 0.0
    %104 = vmatpush1.msra.mxu0 0.0
    %105 = vmatprep.subr.mxu0 0.0
    %106 = vmatpush1.msra.mxu0 0.0
    %107 = vmatprep.subr.mxu0 0.0
    %108 = vmatpush1.msra.mxu0 0.0
    %109 = vmatprep.subr.mxu0 0.0
    %110 = vmatpush1.msra.mxu0 0.0
    %111 = vmatprep.subr.mxu0 0.0
    %112 = vmatpush1.msra.mxu0 0.0
    %113 = vmatprep.subr.mxu0 0.0
    %114 = vmatpush1.msra.mxu0 0.0
    %115 = vmatprep.subr.mxu0 0.0
    %116 = vmatpush1.msra.mxu0 0.0
    %117 = vmatprep.subr.mxu0 0.0
    %118 = vmatpush1.msra.mxu0 0.0
    %119 = vmatprep.subr.mxu0 0.0
    %120 = vmatpush1.msra.mxu0 0.0
    %121 = vmatprep.subr.mxu0 0.0
    %122 = vmatpush1.msra.mxu0 0.0
    %123 = vmatprep.subr.mxu0 0.0
    %124 = vmatpush1.msra.mxu0 0.0
    %125 = vmatprep.subr.mxu0 %v39
    %126 = vmatpush1.msra.mxu0 %v38
    %127 = vmatprep.subr.mxu0 %v37
    %128 = vmatpush1.msra.mxu0 %v36
    %129 = vmatprep.subr.mxu0 %v35
    %130 = vmatpush1.msra.mxu0 %v34
    %131 = vmatprep.subr.mxu0 %v33
    %132 = vmatpush1.msra.mxu0 %v32
    %133 = vmatprep.subr.mxu0 0.0
    %134 = vmatpush2.msra.mxu0 0.0
    %135 = vmatprep.subr.mxu0 0.0
    %136 = vmatpush2.msra.mxu0 0.0
    %137 = vmatprep.subr.mxu0 0.0
    %138 = vmatpush2.msra.mxu0 0.0
    %139 = vmatprep.subr.mxu0 0.0
    %140 = vmatpush2.msra.mxu0 0.0
    %141 = vmatprep.subr.mxu0 0.0
    %142 = vmatpush2.msra.mxu0 0.0
    %143 = vmatprep.subr.mxu0 0.0
    %144 = vmatpush2.msra.mxu0 0.0
    %145 = vmatprep.subr.mxu0 0.0
    %146 = vmatpush2.msra.mxu0 0.0
    %147 = vmatprep.subr.mxu0 0.0
    %148 = vmatpush2.msra.mxu0 0.0
    %149 = vmatprep.subr.mxu0 0.0
    %150 = vmatpush2.msra.mxu0 0.0
    %151 = vmatprep.subr.mxu0 0.0
    %152 = vmatpush2.msra.mxu0 0.0
    %153 = vmatprep.subr.mxu0 0.0
    %154 = vmatpush2.msra.mxu0 0.0
    %155 = vmatprep.subr.mxu0 0.0
    %156 = vmatpush2.msra.mxu0 0.0
    %157 = vmatprep.subr.mxu0 0.0
    %158 = vmatpush2.msra.mxu0 0.0
    %159 = vmatprep.subr.mxu0 0.0
    %160 = vmatpush2.msra.mxu0 0.0
    %161 = vmatprep.subr.mxu0 0.0
    %162 = vmatpush2.msra.mxu0 0.0
    %163 = vmatprep.subr.mxu0 0.0
    %164 = vmatpush2.msra.mxu0 0.0
    %165 = vmatprep.mubr.f32.mxu0 0.0
    %166 = vmatmul.mubr.f32.gmra.mxu0 %v84
    %v167 = vpop.f32.mrf.mxu0
    %v168 = vadd.f32 %v55, %v167
    %v169 = vpop.f32.mrf.mxu0
    %v170 = vadd.f32 %v55, %v169
    %171 = vmatprep.mubr.f32.mxu0 0.0
    %172 = vmatmul.mubr.f32.gmra.mxu0 %v87
    %v173 = vpop.f32.mrf.mxu0
    %v174 = vadd.f32 %v60, %v173
    %v175 = vpop.f32.mrf.mxu0
    %v176 = vadd.f32 %v60, %v175
    %177 = vmatprep.mubr.f32.mxu0 0.0
    %178 = vmatmul.mubr.f32.gmra.mxu0 %v90
    %v179 = vpop.f32.mrf.mxu0
    %v180 = vadd.f32 %v65, %v179
    %v181 = vpop.f32.mrf.mxu0
    %v182 = vadd.f32 %v65, %v181
    %183 = vmatprep.mubr.f32.mxu0 0.0
    %184 = vmatmul.mubr.f32.gmra.mxu0 %v93
    %v185 = vpop.f32.mrf.mxu0
    %v186 = vadd.f32 %v70, %v185
    %v187 = vpop.f32.mrf.mxu0
    %v188 = vadd.f32 %v70, %v187
    %189 = vmatprep.mubr.f32.mxu0 0.0
    %190 = vmatmul.mubr.f32.gmra.mxu0 %v96
    %v191 = vpop.f32.mrf.mxu0
    %v192 = vadd.f32 %v75, %v191
    %v193 = vpop.f32.mrf.mxu0
    %v194 = vadd.f32 %v75, %v193
    %195 = vmatprep.mubr.f32.mxu0 0.0
    %196 = vmatmul.mubr.f32.gmra.mxu0 %v99
    %v197 = vpop.f32.mrf.mxu0
    %v198 = vadd.f32 %v80, %v197
    %v199 = vpop.f32.mrf.mxu0
    %v200 = vadd.f32 %v80, %v199
    %201 = vdwg.mxu0
    %202 = vxpose.xlu0.b32.start [1/16] %v192, 128
    %203 = vxpose.xlu0.b32.cont [2/16] 0.0, 128
    %204 = vxpose.xlu0.b32.cont [3/16] 0.0, 128
    %205 = vxpose.xlu0.b32.cont [4/16] 0.0, 128
    %206 = vxpose.xlu0.b32.cont [5/16] 0.0, 128
    %207 = vxpose.xlu0.b32.cont [6/16] 0.0, 128
    %208 = vxpose.xlu0.b32.cont [7/16] 0.0, 128
    %209 = vxpose.xlu0.b32.cont [8/16] 0.0, 128
    %210 = vxpose.xlu0.b32.cont [9/16] 0.0, 128
    %211 = vxpose.xlu0.b32.cont [10/16] 0.0, 128
    %212 = vxpose.xlu0.b32.cont [11/16] 0.0, 128
    %213 = vxpose.xlu0.b32.cont [12/16] 0.0, 128
    %214 = vxpose.xlu0.b32.cont [13/16] 0.0, 128
    %215 = vxpose.xlu0.b32.cont [14/16] 0.0, 128
    %216 = vxpose.xlu0.b32.cont [15/16] 0.0, 128
    %217 = vxpose.xlu0.b32.end [16/16] 0.0, 128
    %v218 = vpop.trf.xlu0
    %v219 = vpop.trf.xlu0
    %v220 = vpop.trf.xlu0
    %v221 = vpop.trf.xlu0
    %v222 = vpop.trf.xlu0
    %v223 = vpop.trf.xlu0
    %v224 = vpop.trf.xlu0
    %v225 = vpop.trf.xlu0
    %v226 = vpop.trf.xlu0
    %v227 = vpop.trf.xlu0
    %v228 = vpop.trf.xlu0
    %v229 = vpop.trf.xlu0
    %v230 = vpop.trf.xlu0
    %v231 = vpop.trf.xlu0
    %v232 = vpop.trf.xlu0
    %v233 = vpop.trf.xlu0
    %234 = vxpose.xlu0.b32.start [1/16] %v194, 128
    %235 = vxpose.xlu0.b32.cont [2/16] 0.0, 128
    %236 = vxpose.xlu0.b32.cont [3/16] 0.0, 128
    %237 = vxpose.xlu0.b32.cont [4/16] 0.0, 128
    %238 = vxpose.xlu0.b32.cont [5/16] 0.0, 128
    %239 = vxpose.xlu0.b32.cont [6/16] 0.0, 128
    %240 = vxpose.xlu0.b32.cont [7/16] 0.0, 128
    %241 = vxpose.xlu0.b32.cont [8/16] 0.0, 128
    %242 = vxpose.xlu0.b32.cont [9/16] 0.0, 128
    %243 = vxpose.xlu0.b32.cont [10/16] 0.0, 128
    %244 = vxpose.xlu0.b32.cont [11/16] 0.0, 128
    %245 = vxpose.xlu0.b32.cont [12/16] 0.0, 128
    %246 = vxpose.xlu0.b32.cont [13/16] 0.0, 128
    %247 = vxpose.xlu0.b32.cont [14/16] 0.0, 128
    %248 = vxpose.xlu0.b32.cont [15/16] 0.0, 128
    %249 = vxpose.xlu0.b32.end [16/16] 0.0, 128
    %v250 = vpop.trf.xlu0
    %v251 = vpop.trf.xlu0
    %v252 = vpop.trf.xlu0
    %v253 = vpop.trf.xlu0
    %v254 = vpop.trf.xlu0
    %v255 = vpop.trf.xlu0
    %v256 = vpop.trf.xlu0
    %v257 = vpop.trf.xlu0
    %v258 = vpop.trf.xlu0
    %v259 = vpop.trf.xlu0
    %v260 = vpop.trf.xlu0
    %v261 = vpop.trf.xlu0
    %v262 = vpop.trf.xlu0
    %v263 = vpop.trf.xlu0
    %v264 = vpop.trf.xlu0
    %v265 = vpop.trf.xlu0
    %vm266 = vcmask 64512
    %v268 = vsel %vm266, %v218, 0
    %v271 = vsel %vm266, %v219, 0
    %v274 = vsel %vm266, %v220, 0
    %v277 = vsel %vm266, %v221, 0
    %v280 = vsel %vm266, %v222, 0
    %v283 = vsel %vm266, %v223, 0
    %v286 = vsel %vm266, %v224, 0
    %v289 = vsel %vm266, %v225, 0
    %v292 = vsel %vm266, %v226, 0
    %v295 = vsel %vm266, %v227, 0
    %v298 = vsel %vm266, %v228, 0
    %v301 = vsel %vm266, %v229, 0
    %v304 = vsel %vm266, %v230, 0
    %v307 = vsel %vm266, %v231, 0
    %v310 = vsel %vm266, %v232, 0
    %v313 = vsel %vm266, %v233, 0
    %v316 = vsel %vm266, %v250, 0
    %v319 = vsel %vm266, %v251, 0
    %v322 = vsel %vm266, %v252, 0
    %v325 = vsel %vm266, %v253, 0
    %v328 = vsel %vm266, %v254, 0
    %v331 = vsel %vm266, %v255, 0
    %v334 = vsel %vm266, %v256, 0
    %v337 = vsel %vm266, %v257, 0
    %v340 = vsel %vm266, %v258, 0
    %v343 = vsel %vm266, %v259, 0
    %v346 = vsel %vm266, %v260, 0
    %v349 = vsel %vm266, %v261, 0
    %v352 = vsel %vm266, %v262, 0
    %v355 = vsel %vm266, %v263, 0
    %v358 = vsel %vm266, %v264, 0
    %v361 = vsel %vm266, %v265, 0
    %363 = vmatprep.subr.mxu0 0.0
    %364 = vmatpush1.msra.mxu0 0.0
    %365 = vmatprep.subr.mxu0 0.0
    %366 = vmatpush1.msra.mxu0 0.0
    %367 = vmatprep.subr.mxu0 0.0
    %368 = vmatpush1.msra.mxu0 0.0
    %369 = vmatprep.subr.mxu0 0.0
    %370 = vmatpush1.msra.mxu0 0.0
    %371 = vmatprep.subr.mxu0 0.0
    %372 = vmatpush1.msra.mxu0 0.0
    %373 = vmatprep.subr.mxu0 0.0
    %374 = vmatpush1.msra.mxu0 0.0
    %375 = vmatprep.subr.mxu0 0.0
    %376 = vmatpush1.msra.mxu0 0.0
    %377 = vmatprep.subr.mxu0 0.0
    %378 = vmatpush1.msra.mxu0 0.0
    %379 = vmatprep.subr.mxu0 0.0
    %380 = vmatpush1.msra.mxu0 0.0
    %381 = vmatprep.subr.mxu0 0.0
    %382 = vmatpush1.msra.mxu0 0.0
    %383 = vmatprep.subr.mxu0 0.0
    %384 = vmatpush1.msra.mxu0 0.0
    %385 = vmatprep.subr.mxu0 0.0
    %386 = vmatpush1.msra.mxu0 0.0
    %387 = vmatprep.subr.mxu0 0.0
    %388 = vmatpush1.msra.mxu0 0.0
    %389 = vmatprep.subr.mxu0 0.0
    %390 = vmatpush1.msra.mxu0 0.0
    %391 = vmatprep.subr.mxu0 0.0
    %392 = vmatpush1.msra.mxu0 0.0
    %393 = vmatprep.subr.mxu0 %v200
    %394 = vmatpush1.msra.mxu0 %v198
    %395 = vmatprep.subr.mxu0 0.0
    %396 = vmatpush2.msra.mxu0 0.0
    %397 = vmatprep.subr.mxu0 0.0
    %398 = vmatpush2.msra.mxu0 0.0
    %399 = vmatprep.subr.mxu0 0.0
    %400 = vmatpush2.msra.mxu0 0.0
    %401 = vmatprep.subr.mxu0 0.0
    %402 = vmatpush2.msra.mxu0 0.0
    %403 = vmatprep.subr.mxu0 0.0
    %404 = vmatpush2.msra.mxu0 0.0
    %405 = vmatprep.subr.mxu0 0.0
    %406 = vmatpush2.msra.mxu0 0.0
    %407 = vmatprep.subr.mxu0 0.0
    %408 = vmatpush2.msra.mxu0 0.0
    %409 = vmatprep.subr.mxu0 0.0
    %410 = vmatpush2.msra.mxu0 0.0
    %411 = vmatprep.subr.mxu0 0.0
    %412 = vmatpush2.msra.mxu0 0.0
    %413 = vmatprep.subr.mxu0 0.0
    %414 = vmatpush2.msra.mxu0 0.0
    %415 = vmatprep.subr.mxu0 0.0
    %416 = vmatpush2.msra.mxu0 0.0
    %417 = vmatprep.subr.mxu0 0.0
    %418 = vmatpush2.msra.mxu0 0.0
    %419 = vmatprep.subr.mxu0 0.0
    %420 = vmatpush2.msra.mxu0 0.0
    %421 = vmatprep.subr.mxu0 0.0
    %422 = vmatpush2.msra.mxu0 0.0
    %423 = vmatprep.subr.mxu0 0.0
    %424 = vmatpush2.msra.mxu0 0.0
    %425 = vmatprep.subr.mxu0 0.0
    %426 = vmatpush2.msra.mxu0 0.0
    %427 = vmatprep.mubr.f32.mxu0 0.0
    %428 = vmatmul.mubr.f32.gmra.mxu0 %v268
    %v429 = vpop.f32.mrf.mxu0
    %v430 = vadd.f32 0.0, %v429
    %v431 = vpop.f32.mrf.mxu0
    %v432 = vadd.f32 0.0, %v431
    %433 = vmatprep.mubr.f32.mxu0 0.0
    %434 = vmatmul.mubr.f32.gmra.mxu0 %v271
    %v435 = vpop.f32.mrf.mxu0
    %v436 = vadd.f32 0.0, %v435
    %v437 = vpop.f32.mrf.mxu0
    %v438 = vadd.f32 0.0, %v437
    %439 = vmatprep.mubr.f32.mxu0 0.0
    %440 = vmatmul.mubr.f32.gmra.mxu0 %v274
    %v441 = vpop.f32.mrf.mxu0
    %v442 = vadd.f32 0.0, %v441
    %v443 = vpop.f32.mrf.mxu0
    %v444 = vadd.f32 0.0, %v443
    %445 = vmatprep.mubr.f32.mxu0 0.0
    %446 = vmatmul.mubr.f32.gmra.mxu0 %v277
    %v447 = vpop.f32.mrf.mxu0
    %v448 = vadd.f32 0.0, %v447
    %v449 = vpop.f32.mrf.mxu0
    %v450 = vadd.f32 0.0, %v449
    %451 = vmatprep.mubr.f32.mxu0 0.0
    %452 = vmatmul.mubr.f32.gmra.mxu0 %v280
    %v453 = vpop.f32.mrf.mxu0
    %v454 = vadd.f32 0.0, %v453
    %v455 = vpop.f32.mrf.mxu0
    %v456 = vadd.f32 0.0, %v455
    %457 = vmatprep.mubr.f32.mxu0 0.0
    %458 = vmatmul.mubr.f32.gmra.mxu0 %v283
    %v459 = vpop.f32.mrf.mxu0
    %v460 = vadd.f32 0.0, %v459
    %v461 = vpop.f32.mrf.mxu0
    %v462 = vadd.f32 0.0, %v461
    %463 = vmatprep.mubr.f32.mxu0 0.0
    %464 = vmatmul.mubr.f32.gmra.mxu0 %v286
    %v465 = vpop.f32.mrf.mxu0
    %v466 = vadd.f32 0.0, %v465
    %v467 = vpop.f32.mrf.mxu0
    %v468 = vadd.f32 0.0, %v467
    %469 = vmatprep.mubr.f32.mxu0 0.0
    %470 = vmatmul.mubr.f32.gmra.mxu0 %v289
    %v471 = vpop.f32.mrf.mxu0
    %v472 = vadd.f32 0.0, %v471
    %v473 = vpop.f32.mrf.mxu0
    %v474 = vadd.f32 0.0, %v473
    %475 = vmatprep.mubr.f32.mxu0 0.0
    %476 = vmatmul.mubr.f32.gmra.mxu0 %v292
    %v477 = vpop.f32.mrf.mxu0
    %v478 = vadd.f32 0.0, %v477
    %v479 = vpop.f32.mrf.mxu0
    %v480 = vadd.f32 0.0, %v479
    %481 = vmatprep.mubr.f32.mxu0 0.0
    %482 = vmatmul.mubr.f32.gmra.mxu0 %v295
    %v483 = vpop.f32.mrf.mxu0
    %v484 = vadd.f32 0.0, %v483
    %v485 = vpop.f32.mrf.mxu0
    %v486 = vadd.f32 0.0, %v485
    %487 = vmatprep.mubr.f32.mxu0 0.0
    %488 = vmatmul.mubr.f32.gmra.mxu0 %v298
    %v489 = vpop.f32.mrf.mxu0
    %v490 = vadd.f32 0.0, %v489
    %v491 = vpop.f32.mrf.mxu0
    %v492 = vadd.f32 0.0, %v491
    %493 = vmatprep.mubr.f32.mxu0 0.0
    %494 = vmatmul.mubr.f32.gmra.mxu0 %v301
    %v495 = vpop.f32.mrf.mxu0
    %v496 = vadd.f32 0.0, %v495
    %v497 = vpop.f32.mrf.mxu0
    %v498 = vadd.f32 0.0, %v497
    %499 = vmatprep.mubr.f32.mxu0 0.0
    %500 = vmatmul.mubr.f32.gmra.mxu0 %v304
    %v501 = vpop.f32.mrf.mxu0
    %v502 = vadd.f32 0.0, %v501
    %v503 = vpop.f32.mrf.mxu0
    %v504 = vadd.f32 0.0, %v503
    %505 = vmatprep.mubr.f32.mxu0 0.0
    %506 = vmatmul.mubr.f32.gmra.mxu0 %v307
    %v507 = vpop.f32.mrf.mxu0
    %v508 = vadd.f32 0.0, %v507
    %v509 = vpop.f32.mrf.mxu0
    %v510 = vadd.f32 0.0, %v509
    %511 = vmatprep.mubr.f32.mxu0 0.0
    %512 = vmatmul.mubr.f32.gmra.mxu0 %v310
    %v513 = vpop.f32.mrf.mxu0
    %v514 = vadd.f32 0.0, %v513
    %v515 = vpop.f32.mrf.mxu0
    %v516 = vadd.f32 0.0, %v515
    %517 = vmatprep.mubr.f32.mxu0 0.0
    %518 = vmatmul.mubr.f32.gmra.mxu0 %v313
    %v519 = vpop.f32.mrf.mxu0
    %v520 = vadd.f32 0.0, %v519
    %v521 = vpop.f32.mrf.mxu0
    %v522 = vadd.f32 0.0, %v521
    %523 = vmatprep.mubr.f32.mxu0 0.0
    %524 = vmatmul.mubr.f32.gmra.mxu0 %v316
    %v525 = vpop.f32.mrf.mxu0
    %v526 = vadd.f32 0.0, %v525
    %v527 = vpop.f32.mrf.mxu0
    %v528 = vadd.f32 0.0, %v527
    %529 = vmatprep.mubr.f32.mxu0 0.0
    %530 = vmatmul.mubr.f32.gmra.mxu0 %v319
    %v531 = vpop.f32.mrf.mxu0
    %v532 = vadd.f32 0.0, %v531
    %v533 = vpop.f32.mrf.mxu0
    %v534 = vadd.f32 0.0, %v533
    %535 = vmatprep.mubr.f32.mxu0 0.0
    %536 = vmatmul.mubr.f32.gmra.mxu0 %v322
    %v537 = vpop.f32.mrf.mxu0
    %v538 = vadd.f32 0.0, %v537
    %v539 = vpop.f32.mrf.mxu0
    %v540 = vadd.f32 0.0, %v539
    %541 = vmatprep.mubr.f32.mxu0 0.0
    %542 = vmatmul.mubr.f32.gmra.mxu0 %v325
    %v543 = vpop.f32.mrf.mxu0
    %v544 = vadd.f32 0.0, %v543
    %v545 = vpop.f32.mrf.mxu0
    %v546 = vadd.f32 0.0, %v545
    %547 = vmatprep.mubr.f32.mxu0 0.0
    %548 = vmatmul.mubr.f32.gmra.mxu0 %v328
    %v549 = vpop.f32.mrf.mxu0
    %v550 = vadd.f32 0.0, %v549
    %v551 = vpop.f32.mrf.mxu0
    %v552 = vadd.f32 0.0, %v551
    %553 = vmatprep.mubr.f32.mxu0 0.0
    %554 = vmatmul.mubr.f32.gmra.mxu0 %v331
    %v555 = vpop.f32.mrf.mxu0
    %v556 = vadd.f32 0.0, %v555
    %v557 = vpop.f32.mrf.mxu0
    %v558 = vadd.f32 0.0, %v557
    %559 = vmatprep.mubr.f32.mxu0 0.0
    %560 = vmatmul.mubr.f32.gmra.mxu0 %v334
    %v561 = vpop.f32.mrf.mxu0
    %v562 = vadd.f32 0.0, %v561
    %v563 = vpop.f32.mrf.mxu0
    %v564 = vadd.f32 0.0, %v563
    %565 = vmatprep.mubr.f32.mxu0 0.0
    %566 = vmatmul.mubr.f32.gmra.mxu0 %v337
    %v567 = vpop.f32.mrf.mxu0
    %v568 = vadd.f32 0.0, %v567
    %v569 = vpop.f32.mrf.mxu0
    %v570 = vadd.f32 0.0, %v569
    %571 = vmatprep.mubr.f32.mxu0 0.0
    %572 = vmatmul.mubr.f32.gmra.mxu0 %v340
    %v573 = vpop.f32.mrf.mxu0
    %v574 = vadd.f32 0.0, %v573
    %v575 = vpop.f32.mrf.mxu0
    %v576 = vadd.f32 0.0, %v575
    %577 = vmatprep.mubr.f32.mxu0 0.0
    %578 = vmatmul.mubr.f32.gmra.mxu0 %v343
    %v579 = vpop.f32.mrf.mxu0
    %v580 = vadd.f32 0.0, %v579
    %v581 = vpop.f32.mrf.mxu0
    %v582 = vadd.f32 0.0, %v581
    %583 = vmatprep.mubr.f32.mxu0 0.0
    %584 = vmatmul.mubr.f32.gmra.mxu0 %v346
    %v585 = vpop.f32.mrf.mxu0
    %v586 = vadd.f32 0.0, %v585
    %v587 = vpop.f32.mrf.mxu0
    %v588 = vadd.f32 0.0, %v587
    %589 = vmatprep.mubr.f32.mxu0 0.0
    %590 = vmatmul.mubr.f32.gmra.mxu0 %v349
    %v591 = vpop.f32.mrf.mxu0
    %v592 = vadd.f32 0.0, %v591
    %v593 = vpop.f32.mrf.mxu0
    %v594 = vadd.f32 0.0, %v593
    %595 = vmatprep.mubr.f32.mxu0 0.0
    %596 = vmatmul.mubr.f32.gmra.mxu0 %v352
    %v597 = vpop.f32.mrf.mxu0
    %v598 = vadd.f32 0.0, %v597
    %v599 = vpop.f32.mrf.mxu0
    %v600 = vadd.f32 0.0, %v599
    %601 = vmatprep.mubr.f32.mxu0 0.0
    %602 = vmatmul.mubr.f32.gmra.mxu0 %v355
    %v603 = vpop.f32.mrf.mxu0
    %v604 = vadd.f32 0.0, %v603
    %v605 = vpop.f32.mrf.mxu0
    %v606 = vadd.f32 0.0, %v605
    %607 = vmatprep.mubr.f32.mxu0 0.0
    %608 = vmatmul.mubr.f32.gmra.mxu0 %v358
    %v609 = vpop.f32.mrf.mxu0
    %v610 = vadd.f32 0.0, %v609
    %v611 = vpop.f32.mrf.mxu0
    %v612 = vadd.f32 0.0, %v611
    %613 = vmatprep.mubr.f32.mxu0 0.0
    %614 = vmatmul.mubr.f32.gmra.mxu0 %v361
    %v615 = vpop.f32.mrf.mxu0
    %v616 = vadd.f32 0.0, %v615
    %v617 = vpop.f32.mrf.mxu0
    %v618 = vadd.f32 0.0, %v617
    %619 = vdwg.mxu0
    %v620 = vtanh.pop %v430
    %v621 = vtanh.pop %v432
    %v622 = vtanh.pop %v436
    %v623 = vtanh.pop %v438
    %v624 = vtanh.pop %v442
    %v625 = vtanh.pop %v444
    %v626 = vtanh.pop %v448
    %v627 = vtanh.pop %v450
    %v628 = vtanh.pop %v454
    %v629 = vtanh.pop %v456
    %v630 = vtanh.pop %v460
    %v631 = vtanh.pop %v462
    %v632 = vtanh.pop %v466
    %v633 = vtanh.pop %v468
    %v634 = vtanh.pop %v472
    %v635 = vtanh.pop %v474
    %v636 = vtanh.pop %v478
    %v637 = vtanh.pop %v480
    %v638 = vtanh.pop %v484
    %v639 = vtanh.pop %v486
    %v640 = vtanh.pop %v490
    %v641 = vtanh.pop %v492
    %v642 = vtanh.pop %v496
    %v643 = vtanh.pop %v498
    %v644 = vtanh.pop %v502
    %v645 = vtanh.pop %v504
    %v646 = vtanh.pop %v508
    %v647 = vtanh.pop %v510
    %v648 = vtanh.pop %v514
    %v649 = vtanh.pop %v516
    %v650 = vtanh.pop %v520
    %v651 = vtanh.pop %v522
    %v652 = vtanh.pop %v526
    %v653 = vtanh.pop %v528
    %v654 = vtanh.pop %v532
    %v655 = vtanh.pop %v534
    %v656 = vtanh.pop %v538
    %v657 = vtanh.pop %v540
    %v658 = vtanh.pop %v544
    %v659 = vtanh.pop %v546
    %v660 = vtanh.pop %v550
    %v661 = vtanh.pop %v552
    %v662 = vtanh.pop %v556
    %v663 = vtanh.pop %v558
    %v664 = vtanh.pop %v562
    %v665 = vtanh.pop %v564
    %v666 = vtanh.pop %v568
    %v667 = vtanh.pop %v570
    %v668 = vtanh.pop %v574
    %v669 = vtanh.pop %v576
    %v670 = vtanh.pop %v580
    %v671 = vtanh.pop %v582
    %v672 = vtanh.pop %v586
    %v673 = vtanh.pop %v588
    %v674 = vtanh.pop %v592
    %v675 = vtanh.pop %v594
    %v676 = vtanh.pop %v598
    %v677 = vtanh.pop %v600
    %v678 = vtanh.pop %v604
    %v679 = vtanh.pop %v606
    %v680 = vtanh.pop %v610
    %v681 = vtanh.pop %v612
    %v682 = vtanh.pop %v616
    %v683 = vtanh.pop %v618
    %v684 = vld [vmem:[#allocation2] sm:$0xff]
    %v685 = vld [vmem:[#allocation2 + $0x8] sm:$0xff]
    %v686 = vld [vmem:[#allocation2 + $0x10] sm:$0xff]
    %v687 = vld [vmem:[#allocation2 + $0x18] sm:$0xff]
    %v688 = vld [vmem:[#allocation2 + $0x20] sm:$0xff]
    %v689 = vld [vmem:[#allocation2 + $0x28] sm:$0xff]
    %v690 = vld [vmem:[#allocation2 + $0x30] sm:$0xff]
    %v691 = vld [vmem:[#allocation2 + $0x38] sm:$0xff]
    %v692 = vld [vmem:[#allocation2 + $0x40] sm:$0xff]
    %v693 = vld [vmem:[#allocation2 + $0x48] sm:$0xff]
    %v694 = vld [vmem:[#allocation2 + $0x50] sm:$0xff]
    %v695 = vld [vmem:[#allocation2 + $0x58] sm:$0xff]
    %v696 = vld [vmem:[#allocation2 + $0x60] sm:$0xff]
    %v697 = vld [vmem:[#allocation2 + $0x68] sm:$0xff]
    %v698 = vld [vmem:[#allocation2 + $0x70] sm:$0xff]
    %v699 = vld [vmem:[#allocation2 + $0x78] sm:$0xff]
    %v700 = vld [vmem:[#allocation2 + $0x80] sm:$0xff]
    %v701 = vld [vmem:[#allocation2 + $0x88] sm:$0xff]
    %v702 = vld [vmem:[#allocation2 + $0x90] sm:$0xff]
    %v703 = vld [vmem:[#allocation2 + $0x98] sm:$0xff]
    %v704 = vld [vmem:[#allocation2 + $0xa0] sm:$0xff]
    %v705 = vld [vmem:[#allocation2 + $0xa8] sm:$0xff]
    %v706 = vld [vmem:[#allocation2 + $0xb0] sm:$0xff]
    %v707 = vld [vmem:[#allocation2 + $0xb8] sm:$0xff]
    %v708 = vld [vmem:[#allocation2 + $0xc0] sm:$0xff]
    %v709 = vld [vmem:[#allocation2 + $0xc8] sm:$0xff]
    %v710 = vld [vmem:[#allocation2 + $0xd0] sm:$0xff]
    %v711 = vld [vmem:[#allocation2 + $0xd8] sm:$0xff]
    %v712 = vld [vmem:[#allocation2 + $0xe0] sm:$0xff]
    %v713 = vld [vmem:[#allocation2 + $0xe8] sm:$0xff]
    %v714 = vld [vmem:[#allocation2 + $0xf0] sm:$0xff]
    %v715 = vld [vmem:[#allocation2 + $0xf8] sm:$0xff]
    %v716 = vld [vmem:[#allocation2 + $0x100] sm:$0xff]
    %v717 = vld [vmem:[#allocation2 + $0x108] sm:$0xff]
    %v718 = vld [vmem:[#allocation2 + $0x110] sm:$0xff]
    %v719 = vld [vmem:[#allocation2 + $0x118] sm:$0xff]
    %v720 = vld [vmem:[#allocation2 + $0x120] sm:$0xff]
    %v721 = vld [vmem:[#allocation2 + $0x128] sm:$0xff]
    %v722 = vld [vmem:[#allocation2 + $0x130] sm:$0xff]
    %v723 = vld [vmem:[#allocation2 + $0x138] sm:$0xff]
    %v724 = vld [vmem:[#allocation2 + $0x140] sm:$0xff]
    %v725 = vld [vmem:[#allocation2 + $0x148] sm:$0xff]
    %v726 = vld [vmem:[#allocation2 + $0x150] sm:$0xff]
    %v727 = vld [vmem:[#allocation2 + $0x158] sm:$0xff]
    %v728 = vld [vmem:[#allocation2 + $0x160] sm:$0xff]
    %v729 = vld [vmem:[#allocation2 + $0x168] sm:$0xff]
    %v730 = vld [vmem:[#allocation2 + $0x170] sm:$0xff]
    %v731 = vld [vmem:[#allocation2 + $0x178] sm:$0xff]
    %v732 = vld [vmem:[#allocation2 + $0x180] sm:$0xff]
    %v733 = vld [vmem:[#allocation2 + $0x188] sm:$0xff]
    %v734 = vld [vmem:[#allocation2 + $0x190] sm:$0xff]
    %v735 = vld [vmem:[#allocation2 + $0x198] sm:$0xff]
    %v736 = vld [vmem:[#allocation2 + $0x1a0] sm:$0xff]
    %v737 = vld [vmem:[#allocation2 + $0x1a8] sm:$0xff]
    %v738 = vld [vmem:[#allocation2 + $0x1b0] sm:$0xff]
    %v739 = vld [vmem:[#allocation2 + $0x1b8] sm:$0xff]
    %v740 = vld [vmem:[#allocation2 + $0x1c0] sm:$0xff]
    %v741 = vld [vmem:[#allocation2 + $0x1c8] sm:$0xff]
    %v742 = vld [vmem:[#allocation2 + $0x1d0] sm:$0xff]
    %v743 = vld [vmem:[#allocation2 + $0x1d8] sm:$0xff]
    %v744 = vld [vmem:[#allocation2 + $0x1e0] sm:$0xff]
    %v745 = vld [vmem:[#allocation2 + $0x1e8] sm:$0xff]
    %v746 = vld [vmem:[#allocation2 + $0x1f0] sm:$0xff]
    %v747 = vld [vmem:[#allocation2 + $0x1f8] sm:$0xff]
    %v748 = vmul.f32 %v620, %v684
    %v749 = vmul.f32 %v621, %v685
    %v750 = vmul.f32 %v622, %v686
    %v751 = vmul.f32 %v623, %v687
    %v752 = vmul.f32 %v624, %v688
    %v753 = vmul.f32 %v625, %v689
    %v754 = vmul.f32 %v626, %v690
    %v755 = vmul.f32 %v627, %v691
    %v756 = vmul.f32 %v628, %v692
    %v757 = vmul.f32 %v629, %v693
    %v758 = vmul.f32 %v630, %v694
    %v759 = vmul.f32 %v631, %v695
    %v760 = vmul.f32 %v632, %v696
    %v761 = vmul.f32 %v633, %v697
    %v762 = vmul.f32 %v634, %v698
    %v763 = vmul.f32 %v635, %v699
    %v764 = vmul.f32 %v636, %v700
    %v765 = vmul.f32 %v637, %v701
    %v766 = vmul.f32 %v638, %v702
    %v767 = vmul.f32 %v639, %v703
    %v768 = vmul.f32 %v640, %v704
    %v769 = vmul.f32 %v641, %v705
    %v770 = vmul.f32 %v642, %v706
    %v771 = vmul.f32 %v643, %v707
    %v772 = vmul.f32 %v644, %v708
    %v773 = vmul.f32 %v645, %v709
    %v774 = vmul.f32 %v646, %v710
    %v775 = vmul.f32 %v647, %v711
    %v776 = vmul.f32 %v648, %v712
    %v777 = vmul.f32 %v649, %v713
    %v778 = vmul.f32 %v650, %v714
    %v779 = vmul.f32 %v651, %v715
    %v780 = vmul.f32 %v652, %v716
    %v781 = vmul.f32 %v653, %v717
    %v782 = vmul.f32 %v654, %v718
    %v783 = vmul.f32 %v655, %v719
    %v784 = vmul.f32 %v656, %v720
    %v785 = vmul.f32 %v657, %v721
    %v786 = vmul.f32 %v658, %v722
    %v787 = vmul.f32 %v659, %v723
    %v788 = vmul.f32 %v660, %v724
    %v789 = vmul.f32 %v661, %v725
    %v790 = vmul.f32 %v662, %v726
    %v791 = vmul.f32 %v663, %v727
    %v792 = vmul.f32 %v664, %v728
    %v793 = vmul.f32 %v665, %v729
    %v794 = vmul.f32 %v666, %v730
    %v795 = vmul.f32 %v667, %v731
    %v796 = vmul.f32 %v668, %v732
    %v797 = vmul.f32 %v669, %v733
    %v798 = vmul.f32 %v670, %v734
    %v799 = vmul.f32 %v671, %v735
    %v800 = vmul.f32 %v672, %v736
    %v801 = vmul.f32 %v673, %v737
    %v802 = vmul.f32 %v674, %v738
    %v803 = vmul.f32 %v675, %v739
    %v804 = vmul.f32 %v676, %v740
    %v805 = vmul.f32 %v677, %v741
    %v806 = vmul.f32 %v678, %v742
    %v807 = vmul.f32 %v679, %v743
    %v808 = vmul.f32 %v680, %v744
    %v809 = vmul.f32 %v681, %v745
    %v810 = vmul.f32 %v682, %v746
    %v811 = vmul.f32 %v683, %v747
    %812 = vmatprep.subr.mxu0 %v779
    %813 = vmatpush1.xpose.msra.mxu0 %v778
    %814 = vmatprep.subr.mxu0 %v777
    %815 = vmatpush1.xpose.msra.mxu0 %v776
    %816 = vmatprep.subr.mxu0 %v775
    %817 = vmatpush1.xpose.msra.mxu0 %v774
    %818 = vmatprep.subr.mxu0 %v773
    %819 = vmatpush1.xpose.msra.mxu0 %v772
    %820 = vmatprep.subr.mxu0 %v771
    %821 = vmatpush1.xpose.msra.mxu0 %v770
    %822 = vmatprep.subr.mxu0 %v769
    %823 = vmatpush1.xpose.msra.mxu0 %v768
    %824 = vmatprep.subr.mxu0 %v767
    %825 = vmatpush1.xpose.msra.mxu0 %v766
    %826 = vmatprep.subr.mxu0 %v765
    %827 = vmatpush1.xpose.msra.mxu0 %v764
    %828 = vmatprep.subr.mxu0 %v763
    %829 = vmatpush1.xpose.msra.mxu0 %v762
    %830 = vmatprep.subr.mxu0 %v761
    %831 = vmatpush1.xpose.msra.mxu0 %v760
    %832 = vmatprep.subr.mxu0 %v759
    %833 = vmatpush1.xpose.msra.mxu0 %v758
    %834 = vmatprep.subr.mxu0 %v757
    %835 = vmatpush1.xpose.msra.mxu0 %v756
    %836 = vmatprep.subr.mxu0 %v755
    %837 = vmatpush1.xpose.msra.mxu0 %v754
    %838 = vmatprep.subr.mxu0 %v753
    %839 = vmatpush1.xpose.msra.mxu0 %v752
    %840 = vmatprep.subr.mxu0 %v751
    %841 = vmatpush1.xpose.msra.mxu0 %v750
    %842 = vmatprep.subr.mxu0 %v749
    %843 = vmatpush1.xpose.msra.mxu0 %v748
    %844 = vmatprep.subr.mxu0 %v811
    %845 = vmatpush2.xpose.msra.mxu0 %v810
    %846 = vmatprep.subr.mxu0 %v809
    %847 = vmatpush2.xpose.msra.mxu0 %v808
    %848 = vmatprep.subr.mxu0 %v807
    %849 = vmatpush2.xpose.msra.mxu0 %v806
    %850 = vmatprep.subr.mxu0 %v805
    %851 = vmatpush2.xpose.msra.mxu0 %v804
    %852 = vmatprep.subr.mxu0 %v803
    %853 = vmatpush2.xpose.msra.mxu0 %v802
    %854 = vmatprep.subr.mxu0 %v801
    %855 = vmatpush2.xpose.msra.mxu0 %v800
    %856 = vmatprep.subr.mxu0 %v799
    %857 = vmatpush2.xpose.msra.mxu0 %v798
    %858 = vmatprep.subr.mxu0 %v797
    %859 = vmatpush2.xpose.msra.mxu0 %v796
    %860 = vmatprep.subr.mxu0 %v795
    %861 = vmatpush2.xpose.msra.mxu0 %v794
    %862 = vmatprep.subr.mxu0 %v793
    %863 = vmatpush2.xpose.msra.mxu0 %v792
    %864 = vmatprep.subr.mxu0 %v791
    %865 = vmatpush2.xpose.msra.mxu0 %v790
    %866 = vmatprep.subr.mxu0 %v789
    %867 = vmatpush2.xpose.msra.mxu0 %v788
    %868 = vmatprep.subr.mxu0 %v787
    %869 = vmatpush2.xpose.msra.mxu0 %v786
    %870 = vmatprep.subr.mxu0 %v785
    %871 = vmatpush2.xpose.msra.mxu0 %v784
    %872 = vmatprep.subr.mxu0 %v783
    %873 = vmatpush2.xpose.msra.mxu0 %v782
    %874 = vmatprep.subr.mxu0 %v781
    %875 = vmatpush2.xpose.msra.mxu0 %v780
    %876 = vmatprep.mubr.f32.mxu0 %v170
    %877 = vmatmul.mubr.f32.gmra.mxu0 %v168
    %v878 = vpop.f32.mrf.mxu0
    %v879 = vadd.f32 %v32, %v878
    %v880 = vpop.f32.mrf.mxu0
    %v881 = vadd.f32 %v33, %v880
    %882 = vmatprep.mubr.f32.mxu0 %v176
    %883 = vmatmul.mubr.f32.gmra.mxu0 %v174
    %v884 = vpop.f32.mrf.mxu0
    %v885 = vadd.f32 %v34, %v884
    %v886 = vpop.f32.mrf.mxu0
    %v887 = vadd.f32 %v35, %v886
    %888 = vmatprep.mubr.f32.mxu0 %v182
    %889 = vmatmul.mubr.f32.gmra.mxu0 %v180
    %v890 = vpop.f32.mrf.mxu0
    %v891 = vadd.f32 %v36, %v890
    %v892 = vpop.f32.mrf.mxu0
    %v893 = vadd.f32 %v37, %v892
    %894 = vmatprep.mubr.f32.mxu0 %v188
    %895 = vmatmul.mubr.f32.gmra.mxu0 %v186
    %v896 = vpop.f32.mrf.mxu0
    %v897 = vadd.f32 %v38, %v896
    %v898 = vpop.f32.mrf.mxu0
    %v899 = vadd.f32 %v39, %v898
    %900 = vdwg.mxu0
    %901 = vst [vmem:[#allocation5] sm:$0xff] %v879
    %902 = vst [vmem:[#allocation5 + $0x8] sm:$0xff] %v881
    %903 = vst [vmem:[#allocation5 + $0x10] sm:$0xff] %v885
    %904 = vst [vmem:[#allocation5 + $0x18] sm:$0xff] %v887
    %905 = vst [vmem:[#allocation5 + $0x20] sm:$0xff] %v891
    %906 = vst [vmem:[#allocation5 + $0x28] sm:$0xff] %v893
    %907 = vst [vmem:[#allocation5 + $0x30] sm:$0xff] %v897
    %908 = vst [vmem:[#allocation5 + $0x38] sm:$0xff] %v899
    // Predicated region
    $region22: #{tpu_custom_call.1} parent=1 // pred_check
      _
    $region23: #{tpu_custom_call.1} parent=1 // pred_check_branch
      %910 = sbr.rel (0) target = $region25
    $region24: #{tpu_custom_call.1} parent=1 // pred_region
      %s912 = ssub.s32 1024, 1024
      %913 = vsyncadd [#allocation4], %s912
      %s914 = sshll.u32 [#allocation5], 4
      %s915 = int_to_ptr.vmem [resolvable:$true] %s914
      %920 = dma.vmem_to_hbm [thread:$0]  %s915, 1024, %s4, [#allocation4], 256, 256, 16
    $region25: #{tpu_custom_call.1} parent=1 // pred_fallthru
      _
    // Predicated region
    $region26: #{tpu_custom_call.1} parent=1 // pred_check
      _
    $region27: #{tpu_custom_call.1} parent=1 // pred_check_branch
      %922 = sbr.rel (0) target = $region29
    $region28: #{tpu_custom_call.1} parent=1 // pred_region
      %923 = dma.done [#allocation4], 1024
    $region29: #{tpu_custom_call.1} parent=1 // pred_fallthru
      _
    %924 = vsyncpa [#allocation3], 1
    %925 = vsyncpa [#allocation4], 1

</llo_original>
